<compile_context>
chip_gen: v6e
topology: v6e:2x2x1
jax: 0.10.0
libtpu: 0.0.40
codegen_flags: <defaults>
</compile_context>

<pallas_src>
import jax
import jax.numpy as jnp
from jax.experimental import pallas as pl
from jax.experimental.pallas import tpu as pltpu


def _round_up(x, m):
    return ((x + m - 1) // m) * m


def _num_tensorcores():
    """Best-effort TensorCore count of the default device (2 on v7x, else 1)."""
    try:
        dev = jax.devices()[0]
        if dev.platform == "tpu":
            n = getattr(dev, "num_cores", None)
            if n:
                return int(n)
    except Exception:
        pass
    return 1


def _pick_block_b(B, D, H, O, n_tc, vmem_budget_bytes=8 * 1024 * 1024):
    """One batch tile per TensorCore (batch on the 128-lane axis), VMEM-bounded."""
    # Rough per-batch-column VMEM footprint: double-buffered f32 input row,
    # two f32 activations, their bf16 casts, double-buffered f32 output.
    per_col = 2 * D * 4 + 2 * H * 4 + (2 * H + D) * 2 + 2 * O * 4
    cap = max(128, (vmem_budget_bytes // max(per_col, 1)) // 128 * 128)
    bb = _round_up(pl.cdiv(max(B, 1), max(n_tc, 1)), 128)
    return int(max(128, min(bb, cap)))


def critic_kernel(x_ref, w1_ref, b1_ref, w2_ref, b2_ref, w3_ref, b3_ref, o_ref):
    """One batch tile.  x_ref is the raw [block_b, D] f32 slab; all matmul
    outputs are [features, block_b] so the batch axis stays lane-dense."""
    cd = w1_ref.dtype                                   # compute dtype (bf16)
    x = x_ref[...].astype(cd)                           # [bb, D], cast in-kernel

    # fc1 + ReLU: [H, D] @ [D, bb] -> [H, bb] (MXU, f32 accumulation).
    h1 = jnp.dot(w1_ref[...], x.T, preferred_element_type=jnp.float32)
    h1 = jnp.maximum(h1 + b1_ref[...], 0.0)             # f32 epilogue (v5e-safe)

    # fc2 + ReLU
    h2 = jnp.dot(w2_ref[...], h1.astype(cd), preferred_element_type=jnp.float32)
    h2 = jnp.maximum(h2 + b2_ref[...], 0.0)

    # fc3 (no activation); [O, bb] output is lane-dense even for O == 1.
    out = jnp.dot(w3_ref[...], h2.astype(cd), preferred_element_type=jnp.float32)
    o_ref[...] = (out + b3_ref[...]).astype(o_ref.dtype)


def prepare_critic_params(params, compute_dtype=jnp.bfloat16):
    """One-time weight prep (hoisted out of the forward path): transpose to
    [out_features, in_features], cast to bf16, biases as f32 columns."""
    cd = jnp.dtype(compute_dtype)
    H = params["w1"].shape[1]
    O = params["w3"].shape[1]
    return {
        "w1_t": jnp.asarray(params["w1"].T, cd),                      # [H, D]
        "w2_t": jnp.asarray(params["w2"].T, cd),                      # [H, H]
        "w3_t": jnp.asarray(params["w3"].T, cd),                      # [O, H]
        "b1_c": jnp.asarray(params["b1"].reshape(H, 1), jnp.float32),  # [H, 1]
        "b2_c": jnp.asarray(params["b2"].reshape(H, 1), jnp.float32),  # [H, 1]
        "b3_c": jnp.asarray(params["b3"].reshape(O, 1), jnp.float32),  # [O, 1]
    }


def critic_forward(state, prep, *, block_b=None):
    """state: [B, state_dim] float32 (fed raw -- no wrapper transpose/cast/pad).
    prep: output of prepare_critic_params.  Returns [B, O] float32 with the
    same semantics as PyTorch Critic.forward."""
    B, D = state.shape
    H = prep["w1_t"].shape[0]
    O = prep["w3_t"].shape[0]
    cd = prep["w1_t"].dtype

    if block_b is None:
        block_b = _pick_block_b(B, D, H, O, _num_tensorcores())
    block_b = max(128, _round_up(int(block_b), 128))
    grid = (pl.cdiv(B, block_b),)

    # Tiny weights/biases stay fully resident across the whole grid.
    full = lambda a: pl.BlockSpec(a.shape, lambda i: (0, 0))

    flops = 2 * B * (D * H + H * H + H * O)
    bytes_accessed = (
        B * D * 4                                    # raw f32 input read
        + B * O * 4                                  # output writeback
        + (D * H + H * H + H * O) * cd.itemsize      # bf16 weights
        + (2 * H + O) * 4)                           # f32 biases

    out_t = pl.pallas_call(
        critic_kernel,
        grid=grid,
        in_specs=[
            pl.BlockSpec((block_b, D), lambda i: (i, 0)),   # raw x tile
            full(prep["w1_t"]), full(prep["b1_c"]),
            full(prep["w2_t"]), full(prep["b2_c"]),
            full(prep["w3_t"]), full(prep["b3_c"]),
        ],
        out_specs=pl.BlockSpec((O, block_b), lambda i: (0, i)),
        out_shape=jax.ShapeDtypeStruct((O, B), jnp.float32),
        compiler_params=pltpu.CompilerParams(
            dimension_semantics=("parallel",),      # megacore sharding on v7x
            vmem_limit_bytes=32 * 1024 * 1024,      # safe on v5e/v6e/v7x
        ),
        cost_estimate=pl.CostEstimate(
            flops=flops, transcendentals=0, bytes_accessed=bytes_accessed),
    )(state, prep["w1_t"], prep["b1_c"], prep["w2_t"], prep["b2_c"],
      prep["w3_t"], prep["b3_c"])

    # [O, B] -> [B, O]; trivial (a reshape for O == 1).
    return out_t.T


def init_critic_params(key, state_dim, hidden_size, output_size=1):
    """Deterministic init mimicking PyTorch nn.Linear default:
    U(-1/sqrt(fan_in), 1/sqrt(fan_in)) for weight and bias; stored as [in, out]."""
    ks = jax.random.split(key, 6)

    def linear(kw, kb, fan_in, fan_out):
        bound = 1.0 / jnp.sqrt(float(fan_in))
        w = jax.random.uniform(kw, (fan_in, fan_out), jnp.float32, -bound, bound)
        b = jax.random.uniform(kb, (1, fan_out), jnp.float32, -bound, bound)
        return w, b

    w1, b1 = linear(ks[0], ks[1], state_dim, hidden_size)
    w2, b2 = linear(ks[2], ks[3], hidden_size, hidden_size)
    w3, b3 = linear(ks[4], ks[5], hidden_size, output_size)
    return {"w1": w1, "b1": b1, "w2": w2, "b2": b2, "w3": w3, "b3": b3}


def critic_ref(state, params, compute_dtype=jnp.bfloat16):
    """Pure-JAX reference with the same cast discipline as the kernel
    (bf16 matmul inputs, f32 accumulation / bias / ReLU)."""
    cd = jnp.dtype(compute_dtype)
    f32 = jnp.float32
    x = state.astype(cd)
    h1 = jax.nn.relu(
        jnp.dot(x, params["w1"].astype(cd), preferred_element_type=f32) + params["b1"])
    h2 = jax.nn.relu(
        jnp.dot(h1.astype(cd), params["w2"].astype(cd), preferred_element_type=f32) + params["b2"])
    return jnp.dot(h2.astype(cd), params["w3"].astype(cd), preferred_element_type=f32) + params["b3"]


if __name__ == "__main__":
    key = jax.random.PRNGKey(0)
    k_param, k_s1, k_s2 = jax.random.split(key, 3)

    # Small shapes consistent with the module.
    batch, state_dim, hidden_size, output_size = 8, 16, 32, 1
    params = init_critic_params(k_param, state_dim, hidden_size, output_size)
    prep = prepare_critic_params(params)          # one-time weight prep

    fwd = jax.jit(critic_forward, static_argnames=("block_b",))

    # Small batch: single partial tile (block larger than B), grid = 1.
    state = jax.random.normal(k_s1, (batch, state_dim), dtype=jnp.float32)
    out = jax.block_until_ready(fwd(state, prep))
    ref = critic_ref(state, params)
    assert out.shape == (batch, output_size)
    assert jnp.allclose(out, ref, atol=2e-3, rtol=2e-3), float(jnp.max(jnp.abs(out - ref)))

    # Larger ragged batch with a forced small tile: multi-step parallel grid
    # plus a partial edge tile (1000 = 3*256 + 232).
    big_batch = 1000
    state_big = jax.random.normal(k_s2, (big_batch, state_dim), dtype=jnp.float32)
    out_big = jax.block_until_ready(fwd(state_big, prep, block_b=256))
    ref_big = critic_ref(state_big, params)
    assert out_big.shape == (big_batch, output_size)
    assert jnp.allclose(out_big, ref_big, atol=2e-3, rtol=2e-3), float(
        jnp.max(jnp.abs(out_big - ref_big)))

    # Default tile selection (grid sized to the TensorCore count).
    out_big2 = jax.block_until_ready(fwd(state_big, prep))
    assert jnp.allclose(out_big2, ref_big, atol=2e-3, rtol=2e-3), float(
        jnp.max(jnp.abs(out_big2 - ref_big)))

    print("KERNEL_OK")
</pallas_src>

<mosaic_0001>
module attributes {stable_mosaic.version = 11 : i64} {
  func.func @critic_kernel(%arg0: i32, %arg1: memref<128x16xf32, #tpu.memory_space<vmem>>, %arg2: memref<32x16xbf16, #tpu.memory_space<vmem>>, %arg3: memref<32x1xf32, #tpu.memory_space<vmem>>, %arg4: memref<32x32xbf16, #tpu.memory_space<vmem>>, %arg5: memref<32x1xf32, #tpu.memory_space<vmem>>, %arg6: memref<1x32xbf16, #tpu.memory_space<vmem>>, %arg7: memref<1x1xf32, #tpu.memory_space<vmem>>, %arg8: memref<1x128xf32, #tpu.memory_space<vmem>>) attributes {dimension_semantics = [#tpu.dimension_semantics<parallel>], iteration_bounds = array<i64: 1>, scalar_prefetch = 0 : i64, scratch_operands = 0 : i64, tpu.core_type = #tpu.core_type<tc>, window_params = [{transform_indices = @transform_0, window_bounds = array<i64: 128, 16>}, {pipeline_mode = #tpu.pipeline_mode<synchronous>, transform_indices = @transform_1, window_bounds = array<i64: 32, 16>}, {pipeline_mode = #tpu.pipeline_mode<synchronous>, transform_indices = @transform_2, window_bounds = array<i64: 32, 1>}, {pipeline_mode = #tpu.pipeline_mode<synchronous>, transform_indices = @transform_3, window_bounds = array<i64: 32, 32>}, {pipeline_mode = #tpu.pipeline_mode<synchronous>, transform_indices = @transform_4, window_bounds = array<i64: 32, 1>}, {pipeline_mode = #tpu.pipeline_mode<synchronous>, transform_indices = @transform_5, window_bounds = array<i64: 1, 32>}, {pipeline_mode = #tpu.pipeline_mode<synchronous>, transform_indices = @transform_6, window_bounds = array<i64: 1, 1>}, {transform_indices = @transform_7, window_bounds = array<i64: 1, 128>}]} {
    %c0 = arith.constant 0 : index
    %c0_0 = arith.constant 0 : index
    %0 = vector.load %arg1[%c0, %c0_0] : memref<128x16xf32, #tpu.memory_space<vmem>>, vector<128x16xf32>
    %1 = arith.truncf %0 : vector<128x16xf32> to vector<128x16xbf16>
    %c0_1 = arith.constant 0 : index
    %c0_2 = arith.constant 0 : index
    %2 = vector.load %arg2[%c0_1, %c0_2] : memref<32x16xbf16, #tpu.memory_space<vmem>>, vector<32x16xbf16>
    %3 = tpu.transpose %1, [1, 0] : vector<128x16xbf16> -> vector<16x128xbf16>
    %cst = arith.constant dense<0.000000e+00> : vector<32x128xf32>
    %4 = tpu.matmul %2, %3, %cst {dimension_numbers = #tpu.dot_dimension_numbers<[1], [0], [0], [1], [0, 0, 1, 1], [], []>} : vector<32x16xbf16>, vector<16x128xbf16>, vector<32x128xf32> -> vector<32x128xf32>
    %c0_3 = arith.constant 0 : index
    %c0_4 = arith.constant 0 : index
    %5 = vector.load %arg3[%c0_3, %c0_4] : memref<32x1xf32, #tpu.memory_space<vmem>>, vector<32x1xf32>
    %6 = vector.broadcast %5 : vector<32x1xf32> to vector<32x128xf32>
    %7 = arith.addf %4, %6 : vector<32x128xf32>
    %cst_5 = arith.constant 0.000000e+00 : f32
    %8 = vector.broadcast %cst_5 : f32 to vector<32x128xf32>
    %9 = arith.maximumf %7, %8 : vector<32x128xf32>
    %c0_6 = arith.constant 0 : index
    %c0_7 = arith.constant 0 : index
    %10 = vector.load %arg4[%c0_6, %c0_7] : memref<32x32xbf16, #tpu.memory_space<vmem>>, vector<32x32xbf16>
    %11 = arith.truncf %9 : vector<32x128xf32> to vector<32x128xbf16>
    %cst_8 = arith.constant dense<0.000000e+00> : vector<32x128xf32>
    %12 = tpu.matmul %10, %11, %cst_8 {dimension_numbers = #tpu.dot_dimension_numbers<[1], [0], [0], [1], [0, 0, 1, 1], [], []>} : vector<32x32xbf16>, vector<32x128xbf16>, vector<32x128xf32> -> vector<32x128xf32>
    %c0_9 = arith.constant 0 : index
    %c0_10 = arith.constant 0 : index
    %13 = vector.load %arg5[%c0_9, %c0_10] : memref<32x1xf32, #tpu.memory_space<vmem>>, vector<32x1xf32>
    %14 = vector.broadcast %13 : vector<32x1xf32> to vector<32x128xf32>
    %15 = arith.addf %12, %14 : vector<32x128xf32>
    %cst_11 = arith.constant 0.000000e+00 : f32
    %16 = vector.broadcast %cst_11 : f32 to vector<32x128xf32>
    %17 = arith.maximumf %15, %16 : vector<32x128xf32>
    %c0_12 = arith.constant 0 : index
    %c0_13 = arith.constant 0 : index
    %18 = vector.load %arg6[%c0_12, %c0_13] : memref<1x32xbf16, #tpu.memory_space<vmem>>, vector<1x32xbf16>
    %19 = arith.truncf %17 : vector<32x128xf32> to vector<32x128xbf16>
    %cst_14 = arith.constant dense<0.000000e+00> : vector<1x128xf32>
    %20 = tpu.matmul %18, %19, %cst_14 {dimension_numbers = #tpu.dot_dimension_numbers<[1], [0], [0], [1], [0, 0, 1, 1], [], []>} : vector<1x32xbf16>, vector<32x128xbf16>, vector<1x128xf32> -> vector<1x128xf32>
    %c0_15 = arith.constant 0 : index
    %c0_16 = arith.constant 0 : index
    %21 = vector.load %arg7[%c0_15, %c0_16] : memref<1x1xf32, #tpu.memory_space<vmem>>, vector<1x1xf32>
    %22 = vector.broadcast %21 : vector<1x1xf32> to vector<1x128xf32>
    %23 = arith.addf %20, %22 : vector<1x128xf32>
    %c0_17 = arith.constant 0 : index
    %c0_18 = arith.constant 0 : index
    %24 = vector.load %arg8[%c0_17, %c0_18] : memref<1x128xf32, #tpu.memory_space<vmem>>, vector<1x128xf32>
    tpu.vector_store %arg8[%c0_17, %c0_18], %23 {strides = array<i32>} : memref<1x128xf32, #tpu.memory_space<vmem>>, vector<1x128xf32>,
    return
  }
  func.func @transform_0(%arg0: i32) -> (i32, i32) {
    %c0_i32 = arith.constant 0 : i32
    %c0_i32_0 = arith.constant 0 : i32
    return %arg0, %c0_i32 : i32, i32
  }
  func.func @transform_1(%arg0: i32) -> (i32, i32) {
    %c0_i32 = arith.constant 0 : i32
    %c0_i32_0 = arith.constant 0 : i32
    %c0_i32_1 = arith.constant 0 : i32
    return %c0_i32, %c0_i32_0 : i32, i32
  }
  func.func @transform_2(%arg0: i32) -> (i32, i32) {
    %c0_i32 = arith.constant 0 : i32
    %c0_i32_0 = arith.constant 0 : i32
    %c0_i32_1 = arith.constant 0 : i32
    return %c0_i32, %c0_i32_0 : i32, i32
  }
  func.func @transform_3(%arg0: i32) -> (i32, i32) {
    %c0_i32 = arith.constant 0 : i32
    %c0_i32_0 = arith.constant 0 : i32
    %c0_i32_1 = arith.constant 0 : i32
    return %c0_i32, %c0_i32_0 : i32, i32
  }
  func.func @transform_4(%arg0: i32) -> (i32, i32) {
    %c0_i32 = arith.constant 0 : i32
    %c0_i32_0 = arith.constant 0 : i32
    %c0_i32_1 = arith.constant 0 : i32
    return %c0_i32, %c0_i32_0 : i32, i32
  }
  func.func @transform_5(%arg0: i32) -> (i32, i32) {
    %c0_i32 = arith.constant 0 : i32
    %c0_i32_0 = arith.constant 0 : i32
    %c0_i32_1 = arith.constant 0 : i32
    return %c0_i32, %c0_i32_0 : i32, i32
  }
  func.func @transform_6(%arg0: i32) -> (i32, i32) {
    %c0_i32 = arith.constant 0 : i32
    %c0_i32_0 = arith.constant 0 : i32
    %c0_i32_1 = arith.constant 0 : i32
    return %c0_i32, %c0_i32_0 : i32, i32
  }
  func.func @transform_7(%arg0: i32) -> (i32, i32) {
    %c0_i32 = arith.constant 0 : i32
    %c0_i32_0 = arith.constant 0 : i32
    return %c0_i32, %arg0 : i32, i32
  }
}

</mosaic_0001>

<llo_original>
// kernel: critic_forward.1
$region0: #{critic_forward.1}
  #allocation0 [shape = 'u32[]', space=smem, size = 0x4, offset = 0x4, fixed_abs, tag = 'smem constant byte address 0x4 - core index']
  #allocation1 [shape = 'u32[144,128]{1,0:T(1,128)}', space=vmem, size = 0x12000, scoped, tag = 'internal scratch']
  #allocation2 [shape = 'f32[1,1]{1,0:T(1,128)S(1)}', space=vmem, size = 0x200, scoped, tag = 'scoped memory for critic_forward.1']
  %s0 = inlined_call_operand.vmem [shape: f32[8,16], index: 0, kind: input, shape index: {}]
  %s1 = inlined_call_operand.vmem [shape: bf16[32,16], index: 1, kind: input, shape index: {}]
  %s2 = inlined_call_operand.vmem [shape: f32[32,1], index: 2, kind: input, shape index: {}]
  %s3 = inlined_call_operand.vmem [shape: bf16[32,32], index: 3, kind: input, shape index: {}]
  %s4 = inlined_call_operand.vmem [shape: f32[32,1], index: 4, kind: input, shape index: {}]
  %s5 = inlined_call_operand.vmem [shape: bf16[1,32], index: 5, kind: input, shape index: {}]
  %s6 = inlined_call_operand.<no memory space> [shape: f32[1,1], index: 6, kind: input, shape index: {}]
  %s7 = inlined_call_operand.hbm [shape: f32[1,8], index: 7, kind: output, shape index: {}]
  %s8 = sld [smem:[#allocation0]]
  $region38: #{critic_forward.1} parent=0
    _
  %s10 = ssub.s32 1, %s8
  %s11 = scalar_select 0, %s10, %s8
  %v12 = vstv %s6
  %13 = vst [vmem:[#allocation2] sm:$0x1] %v12
  $region1: #{critic_forward.1} parent=0
    #allocation3 [shape = 'u8[512]{0}', space=vmem, size = 0x400, scoped, tag = 'output window, operand 0, single buffered']
    #allocation4 [shape = 's32[1]{0}', space=sflag, size = 0x4, scoped, tag = 'scoped memory for critic_forward.1']
    %14 = vsyncpa [#allocation4], 0
    // Predicated region
    $region2: #{critic_forward.1} parent=1 // pred_check
      _
    $region3: #{critic_forward.1} parent=1 // pred_check_branch
      %16 = sbr.rel (0) target = $region5
    $region4: #{critic_forward.1} parent=1 // pred_region
      _
    $region5: #{critic_forward.1} parent=1 // pred_fallthru
      _
    // Predicated region
    $region6: #{critic_forward.1} parent=1 // pred_check
      _
    $region7: #{critic_forward.1} parent=1 // pred_check_branch
      %18 = sbr.rel (0) target = $region9
    $region8: #{critic_forward.1} parent=1 // pred_region
      _
    $region9: #{critic_forward.1} parent=1 // pred_fallthru
      _
    // Predicated region
    $region10: #{critic_forward.1} parent=1 // pred_check
      _
    $region11: #{critic_forward.1} parent=1 // pred_check_branch
      %20 = sbr.rel (0) target = $region13
    $region12: #{critic_forward.1} parent=1 // pred_region
      _
    $region13: #{critic_forward.1} parent=1 // pred_fallthru
      _
    // Predicated region
    $region14: #{critic_forward.1} parent=1 // pred_check
      _
    $region15: #{critic_forward.1} parent=1 // pred_check_branch
      %22 = sbr.rel (0) target = $region17
    $region16: #{critic_forward.1} parent=1 // pred_region
      _
    $region17: #{critic_forward.1} parent=1 // pred_fallthru
      _
    // Predicated region
    $region18: #{critic_forward.1} parent=1 // pred_check
      _
    $region19: #{critic_forward.1} parent=1 // pred_check_branch
      %24 = sbr.rel (0) target = $region21
    $region20: #{critic_forward.1} parent=1 // pred_region
      _
    $region21: #{critic_forward.1} parent=1 // pred_fallthru
      _
    // Predicated region
    $region22: #{critic_forward.1} parent=1 // pred_check
      _
    $region23: #{critic_forward.1} parent=1 // pred_check_branch
      %26 = sbr.rel (0) target = $region25
    $region24: #{critic_forward.1} parent=1 // pred_region
      _
    $region25: #{critic_forward.1} parent=1 // pred_fallthru
      _
    // Predicated region
    $region26: #{critic_forward.1} parent=1 // pred_check
      _
    $region27: #{critic_forward.1} parent=1 // pred_check_branch
      %28 = sbr.rel (0) target = $region29
    $region28: #{critic_forward.1} parent=1 // pred_region
      _
    $region29: #{critic_forward.1} parent=1 // pred_fallthru
      _
    %v30 = vld [vmem:[%s0] sm:$0xff]
    %v31 = vld [vmem:[%s0 + $0x8] sm:$0xff]
    %v32 = vld [vmem:[%s0 + $0x10] sm:$0xff]
    %v33 = vld [vmem:[%s0 + $0x18] sm:$0xff]
    %v34 = vld [vmem:[%s0 + $0x20] sm:$0xff]
    %v35 = vld [vmem:[%s0 + $0x28] sm:$0xff]
    %v36 = vld [vmem:[%s0 + $0x30] sm:$0xff]
    %v37 = vld [vmem:[%s0 + $0x38] sm:$0xff]
    %v38 = vld [vmem:[%s0 + $0x40] sm:$0xff]
    %v39 = vld [vmem:[%s0 + $0x48] sm:$0xff]
    %v40 = vld [vmem:[%s0 + $0x50] sm:$0xff]
    %v41 = vld [vmem:[%s0 + $0x58] sm:$0xff]
    %v42 = vld [vmem:[%s0 + $0x60] sm:$0xff]
    %v43 = vld [vmem:[%s0 + $0x68] sm:$0xff]
    %v44 = vld [vmem:[%s0 + $0x70] sm:$0xff]
    %v45 = vld [vmem:[%s0 + $0x78] sm:$0xff]
    %v46 = vpack.c.bf16 %v31, %v30
    %v47 = vpack.c.bf16 %v33, %v32
    %v48 = vpack.c.bf16 %v35, %v34
    %v49 = vpack.c.bf16 %v37, %v36
    %v50 = vpack.c.bf16 %v39, %v38
    %v51 = vpack.c.bf16 %v41, %v40
    %v52 = vpack.c.bf16 %v43, %v42
    %v53 = vpack.c.bf16 %v45, %v44
    %v54 = vld [vmem:[%s1] sm:$0xf]
    %v55 = vld [vmem:[%s1 + $0x4] sm:$0xf]
    %v56 = vld [vmem:[%s1 + $0x8] sm:$0xf]
    %v57 = vld [vmem:[%s1 + $0xc] sm:$0xf]
    %v58 = vld [vmem:[%s2] sm:$0xff]
    %v59 = vld [vmem:[%s2 + $0x8] sm:$0xff]
    %v60 = vld [vmem:[%s2 + $0x10] sm:$0xff]
    %v61 = vld [vmem:[%s2 + $0x18] sm:$0xff]
    %63 = vset.pattern.permute.xlu0 0
    %64 = vperm.xlu0 %63, %v58
    %v65 = vpop.permute.xlu0 %64
    %68 = vset.pattern.permute.xlu0 0
    %69 = vperm.xlu0 %68, %v59
    %v70 = vpop.permute.xlu0 %69
    %73 = vset.pattern.permute.xlu0 0
    %74 = vperm.xlu0 %73, %v60
    %v75 = vpop.permute.xlu0 %74
    %78 = vset.pattern.permute.xlu0 0
    %79 = vperm.xlu0 %78, %v61
    %v80 = vpop.permute.xlu0 %79
    %v86 = vunpack.c.l.b16 %v54
    %v87 = vunpack.c.l.b16 %v55
    %v88 = vunpack.c.l.b16 %v56
    %v89 = vunpack.c.l.b16 %v57
    %v90 = vpack.c.b16 %v87, %v86
    %v91 = vpack.c.b16 %v89, %v88
    %vm92 = vcmask 130048
    %v94 = vsel %vm92, %v90, 0
    %v97 = vsel %vm92, %v91, 0
    %v100 = vsel %vm92, %v46, 0
    %v103 = vsel %vm92, %v47, 0
    %v106 = vsel %vm92, %v48, 0
    %v109 = vsel %vm92, %v49, 0
    %v112 = vsel %vm92, %v50, 0
    %v115 = vsel %vm92, %v51, 0
    %v118 = vsel %vm92, %v52, 0
    %v121 = vsel %vm92, %v53, 0
    %123 = vmatprep.subr.bf16.mxu0 0
    %124 = vmatpush1.bf16.xpose.msra.mxu0 %v121
    %125 = vmatprep.subr.bf16.mxu0 0
    %126 = vmatpush1.bf16.xpose.msra.mxu0 %v118
    %127 = vmatprep.subr.bf16.mxu0 0
    %128 = vmatpush1.bf16.xpose.msra.mxu0 %v115
    %129 = vmatprep.subr.bf16.mxu0 0
    %130 = vmatpush1.bf16.xpose.msra.mxu0 %v112
    %131 = vmatprep.subr.bf16.mxu0 0
    %132 = vmatpush1.bf16.xpose.msra.mxu0 %v109
    %133 = vmatprep.subr.bf16.mxu0 0
    %134 = vmatpush1.bf16.xpose.msra.mxu0 %v106
    %135 = vmatprep.subr.bf16.mxu0 0
    %136 = vmatpush1.bf16.xpose.msra.mxu0 %v103
    %137 = vmatprep.subr.bf16.mxu0 0
    %138 = vmatpush1.bf16.xpose.msra.mxu0 %v100
    %139 = vmatprep.subr.bf16.mxu0 0
    %140 = vmatpush2.bf16.xpose.msra.mxu0 0
    %141 = vmatprep.subr.bf16.mxu0 0
    %142 = vmatpush2.bf16.xpose.msra.mxu0 0
    %143 = vmatprep.subr.bf16.mxu0 0
    %144 = vmatpush2.bf16.xpose.msra.mxu0 0
    %145 = vmatprep.subr.bf16.mxu0 0
    %146 = vmatpush2.bf16.xpose.msra.mxu0 0
    %147 = vmatprep.subr.bf16.mxu0 0
    %148 = vmatpush2.bf16.xpose.msra.mxu0 0
    %149 = vmatprep.subr.bf16.mxu0 0
    %150 = vmatpush2.bf16.xpose.msra.mxu0 0
    %151 = vmatprep.subr.bf16.mxu0 0
    %152 = vmatpush2.bf16.xpose.msra.mxu0 0
    %153 = vmatprep.subr.bf16.mxu0 0
    %154 = vmatpush2.bf16.xpose.msra.mxu0 0
    %155 = vmatprep.mubr.bf16.mxu0 0
    %156 = vmatmul.mubr.bf16.gmra.mxu0 %v94
    %v157 = vpop.f32.mrf.mxu0
    %v158 = vadd.f32 %v65, %v157
    %v159 = vpop.f32.mrf.mxu0
    %v160 = vpop.f32.mrf.mxu0
    %v161 = vadd.f32 %v70, %v160
    %v162 = vpop.f32.mrf.mxu0
    %163 = vmatprep.mubr.bf16.mxu0 0
    %164 = vmatmul.mubr.bf16.gmra.mxu0 %v97
    %v165 = vpop.f32.mrf.mxu0
    %v166 = vadd.f32 %v75, %v165
    %v167 = vpop.f32.mrf.mxu0
    %v168 = vpop.f32.mrf.mxu0
    %v169 = vadd.f32 %v80, %v168
    %v170 = vpop.f32.mrf.mxu0
    %171 = vdwg.mxu0
    %v172 = vmax.f32 %v158, 0.0
    %v173 = vmax.f32 %v161, 0.0
    %v174 = vmax.f32 %v166, 0.0
    %v175 = vmax.f32 %v169, 0.0
    %v176 = vld [vmem:[%s3] sm:$0xf]
    %v177 = vld [vmem:[%s3 + $0x4] sm:$0xf]
    %v178 = vld [vmem:[%s3 + $0x8] sm:$0xf]
    %v179 = vld [vmem:[%s3 + $0xc] sm:$0xf]
    %v180 = vpack.c.bf16 %v173, %v172
    %v181 = vpack.c.bf16 %v175, %v174
    %v182 = vld [vmem:[%s4] sm:$0xff]
    %v183 = vld [vmem:[%s4 + $0x8] sm:$0xff]
    %v184 = vld [vmem:[%s4 + $0x10] sm:$0xff]
    %v185 = vld [vmem:[%s4 + $0x18] sm:$0xff]
    %187 = vset.pattern.permute.xlu0 0
    %188 = vperm.xlu0 %187, %v182
    %v189 = vpop.permute.xlu0 %188
    %192 = vset.pattern.permute.xlu0 0
    %193 = vperm.xlu0 %192, %v183
    %v194 = vpop.permute.xlu0 %193
    %197 = vset.pattern.permute.xlu0 0
    %198 = vperm.xlu0 %197, %v184
    %v199 = vpop.permute.xlu0 %198
    %202 = vset.pattern.permute.xlu0 0
    %203 = vperm.xlu0 %202, %v185
    %v204 = vpop.permute.xlu0 %203
    %v210 = vunpack.c.l.b16 %v176
    %v211 = vunpack.c.l.b16 %v177
    %v212 = vunpack.c.l.b16 %v178
    %v213 = vunpack.c.l.b16 %v179
    %v214 = vpack.c.b16 %v211, %v210
    %v215 = vpack.c.b16 %v213, %v212
    %vm216 = vcmask 261120
    %v218 = vsel %vm216, %v214, 0
    %v221 = vsel %vm216, %v215, 0
    %223 = vmatprep.subr.bf16.mxu0 0
    %224 = vmatpush1.bf16.msra.mxu0 0
    %225 = vmatprep.subr.bf16.mxu0 0
    %226 = vmatpush1.bf16.msra.mxu0 0
    %227 = vmatprep.subr.bf16.mxu0 0
    %228 = vmatpush1.bf16.msra.mxu0 0
    %229 = vmatprep.subr.bf16.mxu0 0
    %230 = vmatpush1.bf16.msra.mxu0 0
    %231 = vmatprep.subr.bf16.mxu0 0
    %232 = vmatpush1.bf16.msra.mxu0 0
    %233 = vmatprep.subr.bf16.mxu0 0
    %234 = vmatpush1.bf16.msra.mxu0 0
    %235 = vmatprep.subr.bf16.mxu0 0
    %236 = vmatpush1.bf16.msra.mxu0 %v181
    %237 = vmatprep.subr.bf16.mxu0 0
    %238 = vmatpush1.bf16.msra.mxu0 %v180
    %239 = vmatprep.subr.bf16.mxu0 0
    %240 = vmatpush2.bf16.msra.mxu0 0
    %241 = vmatprep.subr.bf16.mxu0 0
    %242 = vmatpush2.bf16.msra.mxu0 0
    %243 = vmatprep.subr.bf16.mxu0 0
    %244 = vmatpush2.bf16.msra.mxu0 0
    %245 = vmatprep.subr.bf16.mxu0 0
    %246 = vmatpush2.bf16.msra.mxu0 0
    %247 = vmatprep.subr.bf16.mxu0 0
    %248 = vmatpush2.bf16.msra.mxu0 0
    %249 = vmatprep.subr.bf16.mxu0 0
    %250 = vmatpush2.bf16.msra.mxu0 0
    %251 = vmatprep.subr.bf16.mxu0 0
    %252 = vmatpush2.bf16.msra.mxu0 0
    %253 = vmatprep.subr.bf16.mxu0 0
    %254 = vmatpush2.bf16.msra.mxu0 0
    %255 = vmatprep.mubr.bf16.mxu0 0
    %256 = vmatmul.mubr.bf16.gmra.mxu0 %v218
    %v257 = vpop.f32.mrf.mxu0
    %v258 = vadd.f32 %v189, %v257
    %v259 = vpop.f32.mrf.mxu0
    %v260 = vpop.f32.mrf.mxu0
    %v261 = vadd.f32 %v194, %v260
    %v262 = vpop.f32.mrf.mxu0
    %263 = vmatprep.mubr.bf16.mxu0 0
    %264 = vmatmul.mubr.bf16.gmra.mxu0 %v221
    %v265 = vpop.f32.mrf.mxu0
    %v266 = vadd.f32 %v199, %v265
    %v267 = vpop.f32.mrf.mxu0
    %v268 = vpop.f32.mrf.mxu0
    %v269 = vadd.f32 %v204, %v268
    %v270 = vpop.f32.mrf.mxu0
    %271 = vdwg.mxu0
    %v272 = vmax.f32 %v258, 0.0
    %v273 = vmax.f32 %v261, 0.0
    %v274 = vmax.f32 %v266, 0.0
    %v275 = vmax.f32 %v269, 0.0
    %v276 = vld [vmem:[%s5] sm:$0x1]
    %v277 = vpack.c.bf16 %v273, %v272
    %v278 = vpack.c.bf16 %v275, %v274
    %v279 = vld [vmem:[#allocation2] sm:$0x1]
    %281 = vset.pattern.permute.xlu0 0
    %282 = vperm.xlu0 %281, %v279
    %v283 = vpop.permute.xlu0 %282
    %v285 = vlaneseq
    %v286 = vshrl.u32 %v285, 7
    %v287 = vsub.s32 0, %v286
    %v288 = vrot.slane %v283, %v287
    %v290 = vsel %vm216, %v276, 0
    %292 = vmatprep.subr.bf16.mxu0 0
    %293 = vmatpush1.bf16.msra.mxu0 0
    %294 = vmatprep.subr.bf16.mxu0 0
    %295 = vmatpush1.bf16.msra.mxu0 0
    %296 = vmatprep.subr.bf16.mxu0 0
    %297 = vmatpush1.bf16.msra.mxu0 0
    %298 = vmatprep.subr.bf16.mxu0 0
    %299 = vmatpush1.bf16.msra.mxu0 0
    %300 = vmatprep.subr.bf16.mxu0 0
    %301 = vmatpush1.bf16.msra.mxu0 0
    %302 = vmatprep.subr.bf16.mxu0 0
    %303 = vmatpush1.bf16.msra.mxu0 0
    %304 = vmatprep.subr.bf16.mxu0 0
    %305 = vmatpush1.bf16.msra.mxu0 %v278
    %306 = vmatprep.subr.bf16.mxu0 0
    %307 = vmatpush1.bf16.msra.mxu0 %v277
    %308 = vmatprep.subr.bf16.mxu0 0
    %309 = vmatpush2.bf16.msra.mxu0 0
    %310 = vmatprep.subr.bf16.mxu0 0
    %311 = vmatpush2.bf16.msra.mxu0 0
    %312 = vmatprep.subr.bf16.mxu0 0
    %313 = vmatpush2.bf16.msra.mxu0 0
    %314 = vmatprep.subr.bf16.mxu0 0
    %315 = vmatpush2.bf16.msra.mxu0 0
    %316 = vmatprep.subr.bf16.mxu0 0
    %317 = vmatpush2.bf16.msra.mxu0 0
    %318 = vmatprep.subr.bf16.mxu0 0
    %319 = vmatpush2.bf16.msra.mxu0 0
    %320 = vmatprep.subr.bf16.mxu0 0
    %321 = vmatpush2.bf16.msra.mxu0 0
    %322 = vmatprep.subr.bf16.mxu0 0
    %323 = vmatpush2.bf16.msra.mxu0 0
    %324 = vmatprep.mubr.bf16.mxu0 0
    %325 = vmatmul.mubr.bf16.gmra.mxu0 %v290
    %v326 = vpop.f32.mrf.mxu0
    %v327 = vadd.f32 %v288, %v326
    %v328 = vpop.f32.mrf.mxu0
    %v329 = vpop.f32.mrf.mxu0
    %v330 = vpop.f32.mrf.mxu0
    %331 = vdwg.mxu0
    %332 = vst [vmem:[#allocation3] sm:$0x1] %v327
    // Predicated region
    $region30: #{critic_forward.1} parent=1 // pred_check
      _
    $region31: #{critic_forward.1} parent=1 // pred_check_branch
      %334 = sbr.rel (0) target = $region33
    $region32: #{critic_forward.1} parent=1 // pred_region
      %s336 = ssub.s32 16, 16
      %337 = vsyncadd [#allocation4], %s336
      %s339 = sshll.u32 [#allocation3], 4
      %s340 = int_to_ptr.vmem [resolvable:$true] %s339
      %342 = dma.vmem_to_hbm [thread:$0]  %s340, 16, %s7, [#allocation4]
    $region33: #{critic_forward.1} parent=1 // pred_fallthru
      _
    // Predicated region
    $region34: #{critic_forward.1} parent=1 // pred_check
      _
    $region35: #{critic_forward.1} parent=1 // pred_check_branch
      %344 = sbr.rel (0) target = $region37
    $region36: #{critic_forward.1} parent=1 // pred_region
      %345 = dma.done [#allocation4], 16
    $region37: #{critic_forward.1} parent=1 // pred_fallthru
      _
    %346 = vsyncpa [#allocation4], 1

</llo_original>
